<compile_context>
chip_gen: v5e
topology: v5e:2x2
jax: 0.10.0
libtpu: 0.0.40
codegen_flags: <defaults>
</compile_context>

<pallas_src>
import numpy as np
import jax
import jax.numpy as jnp
from jax.experimental import pallas as pl
from jax.experimental.pallas import tpu as pltpu

# ---------------- problem sizes (small, consistent with the forward) ----------------
B = 2        # batch size
T = 8        # demo sequence length (max)
N = 6        # graph nodes per frame
F = 16       # node feature dim
H = 32       # hidden / embedding dim
C = 10       # number of predicate classes
CPAD = 128   # class dim padded to a full vreg lane width (exactly one MXU output pass)


# ------------- fused Pallas kernel: encoder('avg') + classifier + CE loss + top1 -------------
def fused_kernel(len_ref, goal_ref, x_ref, w1_ref, b1_ref, w2_ref, b2_ref, stats_ref):
    # 1) node MLP on all B*T*N rows in one MXU pass: (96,16)bf16 @ (16,32)bf16 -> f32
    h = jnp.dot(x_ref[...], w1_ref[...], preferred_element_type=jnp.float32) + b1_ref[...]
    h = jnp.maximum(h, 0.0)                                                   # relu, (B*T*N, H) f32

    # 2) block-diagonal reduction weights built in-kernel (no HBM input, no int div/mod):
    #    row b, column r is "valid" iff  b*T*N <= r < b*T*N + len_b*N,
    #    with weight 1/(N*max(len_b,1))  ->  emb[b] = mean_nodes(mean_valid_timesteps(h_b))
    len_col = len_ref[...]                                                    # (B, 1) int32
    r = jax.lax.broadcasted_iota(jnp.int32, (B, B * T * N), 1)                # column index
    b_row = jax.lax.broadcasted_iota(jnp.int32, (B, B * T * N), 0)            # row (=batch) index
    lo = b_row * (T * N)
    valid = (r >= lo) & (r < lo + len_col * N)
    inv = 1.0 / (float(N) * jnp.maximum(len_col, 1).astype(jnp.float32))      # (B,1) length-0 guard
    w_red = jnp.where(valid, inv, 0.0).astype(jnp.bfloat16)                   # (B, B*T*N)

    emb = jnp.dot(w_red, h.astype(jnp.bfloat16),
                  preferred_element_type=jnp.float32)                         # (B, H) f32

    # 3) classifier; class dim already padded to 128 lanes, padded bias == -1e30 (f32)
    logits = jnp.dot(emb.astype(jnp.bfloat16), w2_ref[...],
                     preferred_element_type=jnp.float32) + b2_ref[...]        # (B, CPAD) f32

    # numerically stable log-softmax (padded lanes underflow to exactly 0 in the sum)
    m = jnp.max(logits, axis=-1, keepdims=True)
    z = logits - m
    lse = jnp.log(jnp.sum(jnp.exp(z), axis=-1, keepdims=True))
    logp = z - lse                                                            # (B, CPAD)

    # 4) CE loss + top1 via one vectorized lane compare (goal assumed in [0, C);
    #    a goal >= C would select a -1e30 padded lane).
    goal_col = goal_ref[...]                                                  # (B, 1) int32
    col = jax.lax.broadcasted_iota(jnp.int32, (B, CPAD), 1)
    onehot = (col == goal_col).astype(jnp.float32)                            # (B, CPAD)
    tgt_logp = jnp.sum(logp * onehot, axis=-1, keepdims=True)                 # (B, 1)

    # argmax via first-index-of-max (padded lanes are -1e30, never selected)
    pred = jnp.min(jnp.where(logits == m, col, CPAD), axis=-1, keepdims=True) # (B, 1)
    correct = (pred == goal_col).astype(jnp.float32)                          # (B, 1)

    # 5) pack -tgt_logp into lane 0 and correct into lane 1, ONE cross-sublane reduction,
    #    one unmasked lane-dense (1, CPAD) store: lane 0 = loss, lane 1 = top1.
    packed = jnp.where(col == 0, -tgt_logp, 0.0) + jnp.where(col == 1, correct, 0.0)
    stats_ref[...] = jnp.sum(packed, axis=0, keepdims=True) * (1.0 / B)


def _pallas_forward(len2, goal2, x2, W1, b1, W2p, b2p):
    vmem = pl.BlockSpec(memory_space=pltpu.MemorySpace.VMEM)
    return pl.pallas_call(
        fused_kernel,
        out_shape=jax.ShapeDtypeStruct((1, CPAD), jnp.float32),
        in_specs=[vmem] * 7,
        out_specs=vmem,
    )(len2, goal2, x2, W1, b1, W2p, b2p)


# -------- single jitted device-side path: sort-gather + layout plumbing + fused kernel --------
@jax.jit
def _forward_jit(x, goal, lengths, idx, W1, b1, W2p, b2p):
    x_sorted = x[idx]                                             # (B, T, N, F)
    goal2 = goal[idx].astype(jnp.int32).reshape(B, 1)             # (B, 1)
    len2 = lengths[idx].astype(jnp.int32).reshape(B, 1)           # (B, 1)
    # layout plumbing in the wrapper (free in HBM; avoids in-kernel non-(8,128) reshape)
    x2 = x_sorted.reshape(B * T * N, F).astype(jnp.bfloat16)
    stats = _pallas_forward(len2, goal2, x2, W1, b1, W2p, b2p)
    return stats[0, 0], stats[0, 1]


# ---------------- host glue: _sort_by_length equivalent ----------------
def sort_by_length_idx(batch_length):
    # exact semantics of the torch helper: argsort ascending then reverse -> descending
    return np.array(np.argsort(np.array(list(batch_length)))[::-1])


def graph_demo2predicate_forward(data, params):
    """data = ((demo_index, graph_length, graph_input, file_name), goal_index, valid_action_idx)"""
    (batch_demo_index, batch_graph_length, batch_graph_input, batch_file_name) = data[0]
    batch_goal_index = data[1]
    # data[2] (valid action indices) is only consumed by the LSTM encoder variants; unused for 'avg'.

    idx = jnp.asarray(sort_by_length_idx(batch_graph_length), dtype=jnp.int32)
    lengths = jnp.asarray(np.array(batch_graph_length), dtype=jnp.int32)

    loss, top1 = _forward_jit(batch_graph_input, batch_goal_index, lengths, idx,
                              params["W1"], params["b1"], params["W2p"], params["b2p"])
    info = {"loss": loss, "top1": top1}
    return loss, info


# ---------------- deterministic parameter init (classifier padding hoisted here) ----------------
def init_params():
    k = jax.random.PRNGKey(42)
    k1, k2 = jax.random.split(k)
    W1 = jax.random.normal(k1, (F, H), dtype=jnp.float32) * 0.1
    b1 = jnp.zeros((1, H), dtype=jnp.float32)
    W2 = jax.random.normal(k2, (H, C), dtype=jnp.float32) * 0.1
    b2 = jnp.zeros((1, C), dtype=jnp.float32)
    # parameter-static padding/casting done ONCE here (not per forward):
    W2p = jnp.zeros((H, CPAD), jnp.float32).at[:, :C].set(W2).astype(jnp.bfloat16)
    b2p = jnp.full((1, CPAD), -1e30, jnp.float32).at[:, :C].set(b2)   # f32 keeps the pad sentinel exact
    return {"W1": W1.astype(jnp.bfloat16), "b1": b1, "W2p": W2p, "b2p": b2p}


if __name__ == "__main__":
    key = jax.random.PRNGKey(0)
    kx, kg = jax.random.split(key)

    batch_graph_input = jax.random.normal(kx, (B, T, N, F), dtype=jnp.float32)
    batch_graph_length = [5, 8]                       # per-sample valid sequence lengths
    batch_demo_index = list(range(B))
    batch_file_name = ["demo_%d" % i for i in range(B)]
    batch_goal_index = jax.random.randint(kg, (B,), 0, C, dtype=jnp.int32)
    batch_valid_action_with_walk_index = [None] * B   # unused by the 'avg' encoder

    data = ((batch_demo_index, batch_graph_length, batch_graph_input, batch_file_name),
            batch_goal_index,
            batch_valid_action_with_walk_index)

    params = init_params()
    loss, info = graph_demo2predicate_forward(data, params)
    loss = jax.block_until_ready(loss)
    jax.block_until_ready(info["top1"])

    print("KERNEL_OK")
</pallas_src>

<mosaic_0001>
module attributes {stable_mosaic.version = 11 : i64} {
  func.func @fused_kernel(%arg0: memref<2x1xi32, #tpu.memory_space<vmem>>, %arg1: memref<2x1xi32, #tpu.memory_space<vmem>>, %arg2: memref<96x16xbf16, #tpu.memory_space<vmem>>, %arg3: memref<16x32xbf16, #tpu.memory_space<vmem>>, %arg4: memref<1x32xf32, #tpu.memory_space<vmem>>, %arg5: memref<32x128xbf16, #tpu.memory_space<vmem>>, %arg6: memref<1x128xf32, #tpu.memory_space<vmem>>, %arg7: memref<1x128xf32, #tpu.memory_space<vmem>>) attributes {dimension_semantics = [], scalar_prefetch = 0 : i64, scratch_operands = 0 : i64, tpu.core_type = #tpu.core_type<tc>} {
    %c0 = arith.constant 0 : index
    %c0_0 = arith.constant 0 : index
    %0 = vector.load %arg2[%c0, %c0_0] : memref<96x16xbf16, #tpu.memory_space<vmem>>, vector<96x16xbf16>
    %c0_1 = arith.constant 0 : index
    %c0_2 = arith.constant 0 : index
    %1 = vector.load %arg3[%c0_1, %c0_2] : memref<16x32xbf16, #tpu.memory_space<vmem>>, vector<16x32xbf16>
    %cst = arith.constant dense<0.000000e+00> : vector<96x32xf32>
    %2 = tpu.matmul %0, %1, %cst {dimension_numbers = #tpu.dot_dimension_numbers<[1], [0], [0], [1], [0, 0, 1, 1], [], []>} : vector<96x16xbf16>, vector<16x32xbf16>, vector<96x32xf32> -> vector<96x32xf32>
    %c0_3 = arith.constant 0 : index
    %c0_4 = arith.constant 0 : index
    %3 = vector.load %arg4[%c0_3, %c0_4] : memref<1x32xf32, #tpu.memory_space<vmem>>, vector<1x32xf32>
    %4 = vector.broadcast %3 : vector<1x32xf32> to vector<96x32xf32>
    %5 = arith.addf %2, %4 : vector<96x32xf32>
    %cst_5 = arith.constant 0.000000e+00 : f32
    %6 = vector.broadcast %cst_5 : f32 to vector<96x32xf32>
    %7 = arith.maximumf %5, %6 : vector<96x32xf32>
    %c0_6 = arith.constant 0 : index
    %c0_7 = arith.constant 0 : index
    %8 = vector.load %arg0[%c0_6, %c0_7] : memref<2x1xi32, #tpu.memory_space<vmem>>, vector<2x1xi32>
    %9 = tpu.iota {dimensions = array<i32: 1>} : vector<2x96xi32>
    %10 = tpu.iota {dimensions = array<i32: 0>} : vector<2x96xi32>
    %c48_i32 = arith.constant 48 : i32
    %11 = vector.broadcast %c48_i32 : i32 to vector<2x96xi32>
    %12 = arith.muli %10, %11 : vector<2x96xi32>
    %13 = arith.cmpi sge, %9, %12 : vector<2x96xi32>
    %c6_i32 = arith.constant 6 : i32
    %14 = vector.broadcast %c6_i32 : i32 to vector<2x1xi32>
    %15 = arith.muli %8, %14 : vector<2x1xi32>
    %16 = vector.broadcast %15 : vector<2x1xi32> to vector<2x96xi32>
    %17 = arith.addi %12, %16 : vector<2x96xi32>
    %18 = arith.cmpi slt, %9, %17 : vector<2x96xi32>
    %19 = arith.andi %13, %18 : vector<2x96xi1>
    %c1_i32 = arith.constant 1 : i32
    %20 = vector.broadcast %c1_i32 : i32 to vector<2x1xi32>
    %21 = arith.maxsi %8, %20 : vector<2x1xi32>
    %22 = arith.sitofp %21 : vector<2x1xi32> to vector<2x1xf32>
    %cst_8 = arith.constant 6.000000e+00 : f32
    %23 = vector.broadcast %cst_8 : f32 to vector<2x1xf32>
    %24 = arith.mulf %23, %22 : vector<2x1xf32>
    %cst_9 = arith.constant 1.000000e+00 : f32
    %25 = vector.broadcast %cst_9 : f32 to vector<2x1xf32>
    %26 = arith.divf %25, %24 : vector<2x1xf32>
    %cst_10 = arith.constant 0.000000e+00 : f32
    %27 = vector.shape_cast %26 : vector<2x1xf32> to vector<2x1xf32>
    %28 = vector.broadcast %27 : vector<2x1xf32> to vector<2x96xf32>
    %29 = vector.broadcast %cst_10 : f32 to vector<2x96xf32>
    %30 = arith.select %19, %28, %29 : vector<2x96xi1>, vector<2x96xf32>
    %31 = arith.truncf %30 : vector<2x96xf32> to vector<2x96xbf16>
    %32 = arith.truncf %7 : vector<96x32xf32> to vector<96x32xbf16>
    %cst_11 = arith.constant dense<0.000000e+00> : vector<2x32xf32>
    %33 = tpu.matmul %31, %32, %cst_11 {dimension_numbers = #tpu.dot_dimension_numbers<[1], [0], [0], [1], [0, 0, 1, 1], [], []>} : vector<2x96xbf16>, vector<96x32xbf16>, vector<2x32xf32> -> vector<2x32xf32>
    %34 = arith.truncf %33 : vector<2x32xf32> to vector<2x32xbf16>
    %c0_12 = arith.constant 0 : index
    %c0_13 = arith.constant 0 : index
    %35 = vector.load %arg5[%c0_12, %c0_13] : memref<32x128xbf16, #tpu.memory_space<vmem>>, vector<32x128xbf16>
    %cst_14 = arith.constant dense<0.000000e+00> : vector<2x128xf32>
    %36 = tpu.matmul %34, %35, %cst_14 {dimension_numbers = #tpu.dot_dimension_numbers<[1], [0], [0], [1], [0, 0, 1, 1], [], []>} : vector<2x32xbf16>, vector<32x128xbf16>, vector<2x128xf32> -> vector<2x128xf32>
    %c0_15 = arith.constant 0 : index
    %c0_16 = arith.constant 0 : index
    %37 = vector.load %arg6[%c0_15, %c0_16] : memref<1x128xf32, #tpu.memory_space<vmem>>, vector<1x128xf32>
    %38 = vector.broadcast %37 : vector<1x128xf32> to vector<2x128xf32>
    %39 = arith.addf %36, %38 : vector<2x128xf32>
    %cst_17 = arith.constant dense<0xFF800000> : vector<2xf32>
    %40 = vector.multi_reduction <maximumf>, %39, %cst_17 [1] : vector<2x128xf32> to vector<2xf32>
    %41 = vector.shape_cast %40 : vector<2xf32> to vector<2x1xf32>
    %42 = vector.broadcast %41 : vector<2x1xf32> to vector<2x128xf32>
    %43 = arith.subf %39, %42 : vector<2x128xf32>
    %44 = math.exp %43 : vector<2x128xf32>
    %cst_18 = arith.constant dense<0.000000e+00> : vector<2xf32>
    %45 = vector.multi_reduction <add>, %44, %cst_18 [1] : vector<2x128xf32> to vector<2xf32>
    %46 = vector.shape_cast %45 : vector<2xf32> to vector<2x1xf32>
    %47 = math.log %46 : vector<2x1xf32>
    %48 = vector.broadcast %47 : vector<2x1xf32> to vector<2x128xf32>
    %49 = arith.subf %43, %48 : vector<2x128xf32>
    %c0_19 = arith.constant 0 : index
    %c0_20 = arith.constant 0 : index
    %50 = vector.load %arg1[%c0_19, %c0_20] : memref<2x1xi32, #tpu.memory_space<vmem>>, vector<2x1xi32>
    %51 = tpu.iota {dimensions = array<i32: 1>} : vector<2x128xi32>
    %52 = vector.broadcast %50 : vector<2x1xi32> to vector<2x128xi32>
    %53 = arith.cmpi eq, %51, %52 : vector<2x128xi32>
    %54 = arith.extui %53 : vector<2x128xi1> to vector<2x128xi32>
    %55 = arith.sitofp %54 : vector<2x128xi32> to vector<2x128xf32>
    %56 = arith.mulf %49, %55 : vector<2x128xf32>
    %cst_21 = arith.constant dense<0.000000e+00> : vector<2xf32>
    %57 = vector.multi_reduction <add>, %56, %cst_21 [1] : vector<2x128xf32> to vector<2xf32>
    %58 = vector.shape_cast %57 : vector<2xf32> to vector<2x1xf32>
    %59 = vector.broadcast %41 : vector<2x1xf32> to vector<2x128xf32>
    %60 = arith.cmpf oeq, %39, %59 : vector<2x128xf32>
    %c128_i32 = arith.constant 128 : i32
    %61 = vector.broadcast %c128_i32 : i32 to vector<2x128xi32>
    %62 = arith.select %60, %51, %61 : vector<2x128xi1>, vector<2x128xi32>
    %cst_22 = arith.constant dense<2147483647> : vector<2xi32>
    %63 = vector.multi_reduction <minsi>, %62, %cst_22 [1] : vector<2x128xi32> to vector<2xi32>
    %64 = vector.shape_cast %63 : vector<2xi32> to vector<2x1xi32>
    %65 = arith.cmpi eq, %64, %50 : vector<2x1xi32>
    %66 = arith.extui %65 : vector<2x1xi1> to vector<2x1xi32>
    %67 = arith.sitofp %66 : vector<2x1xi32> to vector<2x1xf32>
    %c0_i32 = arith.constant 0 : i32
    %68 = vector.broadcast %c0_i32 : i32 to vector<2x128xi32>
    %69 = arith.cmpi eq, %51, %68 : vector<2x128xi32>
    %cst_23 = arith.constant 0.000000e+00 : f32
    %70 = vector.broadcast %cst_23 : f32 to vector<2x1xf32>
    %71 = arith.subf %70, %58 : vector<2x1xf32>
    %cst_24 = arith.constant 0.000000e+00 : f32
    %72 = vector.shape_cast %71 : vector<2x1xf32> to vector<2x1xf32>
    %73 = vector.broadcast %72 : vector<2x1xf32> to vector<2x128xf32>
    %74 = vector.broadcast %cst_24 : f32 to vector<2x128xf32>
    %75 = arith.select %69, %73, %74 : vector<2x128xi1>, vector<2x128xf32>
    %c1_i32_25 = arith.constant 1 : i32
    %76 = vector.broadcast %c1_i32_25 : i32 to vector<2x128xi32>
    %77 = arith.cmpi eq, %51, %76 : vector<2x128xi32>
    %cst_26 = arith.constant 0.000000e+00 : f32
    %78 = vector.shape_cast %67 : vector<2x1xf32> to vector<2x1xf32>
    %79 = vector.broadcast %78 : vector<2x1xf32> to vector<2x128xf32>
    %80 = vector.broadcast %cst_26 : f32 to vector<2x128xf32>
    %81 = arith.select %77, %79, %80 : vector<2x128xi1>, vector<2x128xf32>
    %82 = arith.addf %75, %81 : vector<2x128xf32>
    %cst_27 = arith.constant dense<0.000000e+00> : vector<128xf32>
    %83 = vector.multi_reduction <add>, %82, %cst_27 [0] : vector<2x128xf32> to vector<128xf32>
    %84 = vector.shape_cast %83 : vector<128xf32> to vector<1x128xf32>
    %cst_28 = arith.constant 5.000000e-01 : f32
    %85 = vector.broadcast %cst_28 : f32 to vector<1x128xf32>
    %86 = arith.mulf %84, %85 : vector<1x128xf32>
    %c0_29 = arith.constant 0 : index
    %c0_30 = arith.constant 0 : index
    %87 = vector.load %arg7[%c0_29, %c0_30] : memref<1x128xf32, #tpu.memory_space<vmem>>, vector<1x128xf32>
    tpu.vector_store %arg7[%c0_29, %c0_30], %86 {strides = array<i32>} : memref<1x128xf32, #tpu.memory_space<vmem>>, vector<1x128xf32>,
    return
  }
}

</mosaic_0001>

<llo_original>
// kernel: _forward_jit.1
$region0: #{_forward_jit.1}
  #allocation0 [shape = 'u32[]', space=smem, size = 0x4, offset = 0x4, fixed_abs, tag = 'smem constant byte address 0x4 - core index']
  #allocation1 [shape = 'u32[72,128]{1,0:T(1,128)}', space=vmem, size = 0x9000, scoped, tag = 'internal scratch']
  %s0 = inlined_call_operand.vmem [shape: s32[2,1], index: 0, kind: input, shape index: {}]
  %s1 = inlined_call_operand.vmem [shape: s32[2,1], index: 1, kind: input, shape index: {}]
  %s2 = inlined_call_operand.vmem [shape: bf16[96,16], index: 2, kind: input, shape index: {}]
  %s3 = inlined_call_operand.vmem [shape: bf16[16,32], index: 3, kind: input, shape index: {}]
  %s4 = inlined_call_operand.vmem [shape: f32[1,32], index: 4, kind: input, shape index: {}]
  %s5 = inlined_call_operand.vmem [shape: bf16[32,128], index: 5, kind: input, shape index: {}]
  %s6 = inlined_call_operand.vmem [shape: f32[1,128], index: 6, kind: input, shape index: {}]
  %s7 = inlined_call_operand.vmem [shape: f32[1,128], index: 7, kind: output, shape index: {}]
  %s8 = sld [smem:[#allocation0]]
  $region38: #{_forward_jit.1} parent=0
    _
  %s10 = ssub.s32 1, %s8
  %s11 = scalar_select 0, %s10, %s8
  // Predicated region
  $region2: #{_forward_jit.1} parent=0 // pred_check
    _
  $region3: #{_forward_jit.1} parent=0 // pred_check_branch
    %13 = sbr.rel (0) target = $region5
  $region4: #{_forward_jit.1} parent=0 // pred_region
    _
  $region5: #{_forward_jit.1} parent=0 // pred_fallthru
    _
  // Predicated region
  $region6: #{_forward_jit.1} parent=0 // pred_check
    _
  $region7: #{_forward_jit.1} parent=0 // pred_check_branch
    %15 = sbr.rel (0) target = $region9
  $region8: #{_forward_jit.1} parent=0 // pred_region
    _
  $region9: #{_forward_jit.1} parent=0 // pred_fallthru
    _
  // Predicated region
  $region10: #{_forward_jit.1} parent=0 // pred_check
    _
  $region11: #{_forward_jit.1} parent=0 // pred_check_branch
    %17 = sbr.rel (0) target = $region13
  $region12: #{_forward_jit.1} parent=0 // pred_region
    _
  $region13: #{_forward_jit.1} parent=0 // pred_fallthru
    _
  // Predicated region
  $region14: #{_forward_jit.1} parent=0 // pred_check
    _
  $region15: #{_forward_jit.1} parent=0 // pred_check_branch
    %19 = sbr.rel (0) target = $region17
  $region16: #{_forward_jit.1} parent=0 // pred_region
    _
  $region17: #{_forward_jit.1} parent=0 // pred_fallthru
    _
  // Predicated region
  $region18: #{_forward_jit.1} parent=0 // pred_check
    _
  $region19: #{_forward_jit.1} parent=0 // pred_check_branch
    %21 = sbr.rel (0) target = $region21
  $region20: #{_forward_jit.1} parent=0 // pred_region
    _
  $region21: #{_forward_jit.1} parent=0 // pred_fallthru
    _
  // Predicated region
  $region22: #{_forward_jit.1} parent=0 // pred_check
    _
  $region23: #{_forward_jit.1} parent=0 // pred_check_branch
    %23 = sbr.rel (0) target = $region25
  $region24: #{_forward_jit.1} parent=0 // pred_region
    _
  $region25: #{_forward_jit.1} parent=0 // pred_fallthru
    _
  // Predicated region
  $region26: #{_forward_jit.1} parent=0 // pred_check
    _
  $region27: #{_forward_jit.1} parent=0 // pred_check_branch
    %25 = sbr.rel (0) target = $region29
  $region28: #{_forward_jit.1} parent=0 // pred_region
    _
  $region29: #{_forward_jit.1} parent=0 // pred_fallthru
    _
  %v27 = vld [vmem:[%s2] sm:$0xf]
  %v28 = vld [vmem:[%s2 + $0x4] sm:$0xf]
  %v29 = vld [vmem:[%s2 + $0x8] sm:$0xf]
  %v30 = vld [vmem:[%s2 + $0xc] sm:$0xf]
  %v31 = vld [vmem:[%s2 + $0x10] sm:$0xf]
  %v32 = vld [vmem:[%s2 + $0x14] sm:$0xf]
  %v33 = vld [vmem:[%s2 + $0x18] sm:$0xf]
  %v34 = vld [vmem:[%s2 + $0x1c] sm:$0xf]
  %v35 = vld [vmem:[%s2 + $0x20] sm:$0xf]
  %v36 = vld [vmem:[%s2 + $0x24] sm:$0xf]
  %v37 = vld [vmem:[%s2 + $0x28] sm:$0xf]
  %v38 = vld [vmem:[%s2 + $0x2c] sm:$0xf]
  %v39 = vld [vmem:[%s3] sm:$0xf]
  %v40 = vld [vmem:[%s3 + $0x4] sm:$0xf]
  %v41 = vld [vmem:[%s4] sm:$0x1]
  %v43 = vperm.slane %v41, 0
  %v57 = vunpack.c.l.b16 %v27
  %v58 = vunpack.c.l.b16 %v28
  %v59 = vunpack.c.l.b16 %v29
  %v60 = vunpack.c.l.b16 %v30
  %v61 = vunpack.c.l.b16 %v31
  %v62 = vunpack.c.l.b16 %v32
  %v63 = vunpack.c.l.b16 %v33
  %v64 = vunpack.c.l.b16 %v34
  %v65 = vunpack.c.l.b16 %v35
  %v66 = vunpack.c.l.b16 %v36
  %v67 = vunpack.c.l.b16 %v37
  %v68 = vunpack.c.l.b16 %v38
  %v69 = vpack.c.b16 %v58, %v57
  %v70 = vpack.c.b16 %v60, %v59
  %v71 = vpack.c.b16 %v62, %v61
  %v72 = vpack.c.b16 %v64, %v63
  %v73 = vpack.c.b16 %v66, %v65
  %v74 = vpack.c.b16 %v68, %v67
  %v77 = vunpack.c.l.b16 %v39
  %v78 = vunpack.c.l.b16 %v40
  %v79 = vpack.c.b16 %v78, %v77
  %vm81 = vcmask 130048
  %v83 = vsel %vm81, %v69, 0
  %v86 = vsel %vm81, %v70, 0
  %v89 = vsel %vm81, %v71, 0
  %v92 = vsel %vm81, %v72, 0
  %v95 = vsel %vm81, %v73, 0
  %v98 = vsel %vm81, %v74, 0
  %100 = vmatpush.bf16.msra.mxu0 0
  %101 = vmatpush.bf16.msra.mxu0 0
  %102 = vmatpush.bf16.msra.mxu0 0
  %103 = vmatpush.bf16.msra.mxu0 0
  %104 = vmatpush.bf16.msra.mxu0 0
  %105 = vmatpush.bf16.msra.mxu0 0
  %106 = vmatpush.bf16.msra.mxu0 0
  %107 = vmatpush.bf16.msra.mxu0 %v79
  %108 = vmatmul.bf16.gmra.mxu0 %v83
  %v109 = vpop.f32.mrf.mxu0
  %v110 = vadd.f32 %v43, %v109
  %v111 = vpop.f32.mrf.mxu0
  %v112 = vadd.f32 %v43, %v111
  %113 = vmatmul.bf16.gmra.mxu0 %v86
  %v114 = vpop.f32.mrf.mxu0
  %v115 = vadd.f32 %v43, %v114
  %v116 = vpop.f32.mrf.mxu0
  %v117 = vadd.f32 %v43, %v116
  %118 = vmatmul.bf16.gmra.mxu0 %v89
  %v119 = vpop.f32.mrf.mxu0
  %v120 = vadd.f32 %v43, %v119
  %v121 = vpop.f32.mrf.mxu0
  %v122 = vadd.f32 %v43, %v121
  %123 = vmatmul.bf16.gmra.mxu0 %v92
  %v124 = vpop.f32.mrf.mxu0
  %v125 = vadd.f32 %v43, %v124
  %v126 = vpop.f32.mrf.mxu0
  %v127 = vadd.f32 %v43, %v126
  %128 = vmatmul.bf16.gmra.mxu0 %v95
  %v129 = vpop.f32.mrf.mxu0
  %v130 = vadd.f32 %v43, %v129
  %v131 = vpop.f32.mrf.mxu0
  %v132 = vadd.f32 %v43, %v131
  %133 = vmatmul.bf16.gmra.mxu0 %v98
  %v134 = vpop.f32.mrf.mxu0
  %v135 = vadd.f32 %v43, %v134
  %v136 = vpop.f32.mrf.mxu0
  %v137 = vadd.f32 %v43, %v136
  %138 = vdwg.mxu0
  %v139 = vmax.f32 %v110, 0.0
  %v140 = vmax.f32 %v112, 0.0
  %v141 = vmax.f32 %v115, 0.0
  %v142 = vmax.f32 %v117, 0.0
  %v143 = vmax.f32 %v120, 0.0
  %v144 = vmax.f32 %v122, 0.0
  %v145 = vmax.f32 %v125, 0.0
  %v146 = vmax.f32 %v127, 0.0
  %v147 = vmax.f32 %v130, 0.0
  %v148 = vmax.f32 %v132, 0.0
  %v149 = vmax.f32 %v135, 0.0
  %v150 = vmax.f32 %v137, 0.0
  %v151 = vld [vmem:[%s0] sm:$0x3]
  %v152 = vlaneseq
  %v153 = vand.u32 %v152, 127
  %v154 = vlaneseq
  %v155 = vshrl.u32 %v154, 7
  %v156 = vmul.u32 %v155, 48
  %vm157 = vcmp.ge.s32.totalorder %v153, %v156
  %v158 = vmul.u32 %v151, 6
  %159 = vset.pattern.permute.xlu0 0
  %160 = vperm.xlu0 %159, %v158
  %v161 = vpop.permute.xlu0 %160
  %v162 = vadd.s32 %v156, %v161
  %vm163 = vcmp.lt.s32.totalorder %v153, %v162
  %vm164 = vmand %vm157, %vm163
  %vm165 = vcmp.gt.s32.totalorder %v151, 1
  %v166 = vsel %vm165, %v151, 1
  %v167 = vcvt.s32.f32 %v166
  %v168 = vmul.f32 %v167, 6.0
  %v169 = vrcp.pop %v168
  %v170 = vmul.f32 %v168, %v169
  %v171 = vsub.f32 1.0, %v170
  %v172 = vmul.f32 %v169, %v171
  %v173 = vadd.f32 %v169, %v172
  %vm174 = vweird.f32 %v168
  %vm175 = vweird.f32 %v169
  %vm176 = vmor %vm174, %vm175
  %v177 = vsel %vm176, %v169, %v173
  %v178 = vand.u32 2147483647, %v168
  %vm179 = vcmp.eq.f32.partialorder %v178, 8.507059e+37
  %v180 = vand.u32 %v168, 2147483648
  %v181 = vor.u32 1.1754944e-38, %v180
  %v182 = vsel %vm179, %v181, %v177
  %v183 = vmul.f32 1.0, %v182
  %185 = vset.pattern.permute.xlu0 0
  %186 = vperm.xlu0 %185, %v183
  %v187 = vpop.permute.xlu0 %186
  %v189 = vsel %vm164, %v187, 0.0
  %v190 = vpack.c.bf16 %v189, %v189
  %v191 = vpack.c.bf16 %v140, %v139
  %v192 = vpack.c.bf16 %v142, %v141
  %v193 = vpack.c.bf16 %v144, %v143
  %v194 = vpack.c.bf16 %v146, %v145
  %v195 = vpack.c.bf16 %v148, %v147
  %v196 = vpack.c.bf16 %v150, %v149
  %vm197 = vcmask 785408
  %v199 = vsel %vm197, %v190, 0
  %201 = vmatpush.bf16.msra.mxu0 0
  %202 = vmatpush.bf16.msra.mxu0 0
  %203 = vmatpush.bf16.msra.mxu0 %v196
  %204 = vmatpush.bf16.msra.mxu0 %v195
  %205 = vmatpush.bf16.msra.mxu0 %v194
  %206 = vmatpush.bf16.msra.mxu0 %v193
  %207 = vmatpush.bf16.msra.mxu0 %v192
  %208 = vmatpush.bf16.msra.mxu0 %v191
  %209 = vmatmul.bf16.gmra.mxu0 %v199
  %v210 = vpop.f32.mrf.mxu0
  %v211 = vadd.f32 0.0, %v210
  %v212 = vpop.f32.mrf.mxu0
  %213 = vdwg.mxu0
  %v214 = vpack.c.bf16 %v211, %v211
  %v215 = vld [vmem:[%s5] sm:$0xf]
  %v216 = vld [vmem:[%s5 + $0x4] sm:$0xf]
  %v217 = vld [vmem:[%s5 + $0x8] sm:$0xf]
  %v218 = vld [vmem:[%s5 + $0xc] sm:$0xf]
  %v219 = vld [vmem:[%s6] sm:$0x1]
  %v221 = vperm.slane %v219, 0
  %v227 = vunpack.c.l.b16 %v215
  %v228 = vunpack.c.l.b16 %v216
  %v229 = vunpack.c.l.b16 %v217
  %v230 = vunpack.c.l.b16 %v218
  %v231 = vpack.c.b16 %v228, %v227
  %v232 = vpack.c.b16 %v230, %v229
  %vm235 = vcmask 261120
  %v237 = vsel %vm235, %v214, 0
  %239 = vmatpush.bf16.msra.mxu0 0
  %240 = vmatpush.bf16.msra.mxu0 0
  %241 = vmatpush.bf16.msra.mxu0 0
  %242 = vmatpush.bf16.msra.mxu0 0
  %243 = vmatpush.bf16.msra.mxu0 0
  %244 = vmatpush.bf16.msra.mxu0 0
  %245 = vmatpush.bf16.msra.mxu0 %v232
  %246 = vmatpush.bf16.msra.mxu0 %v231
  %247 = vmatmul.bf16.gmra.mxu0 %v237
  %v248 = vpop.f32.mrf.mxu0
  %v249 = vadd.f32 %v221, %v248
  %v250 = vpop.f32.mrf.mxu0
  %251 = vdwg.mxu0
  %vm252 = vcmask 1041408
  %v253 = vsel %vm252, %v249, -inf
  %254 = vmax.xlane.f32.xlu0 %v253
  %v255 = vpop.xlane.xlu0 %254
  %v256 = vsub.f32 %v249, %v255
  %v257 = vmul.f32 %v256, 1.442695
  %v258 = vpow.pop %v257
  %v259 = vsel %vm252, %v258, 0.0
  %260 = vadd.xlane.f32.xlu0 %v259
  %v261 = vpop.xlane.xlu0 %260
  %v262 = vlog2.pop %v261
  %v263 = vmul.f32 %v262, 0.6931472
  %v264 = vsub.f32 %v256, %v263
  %v265 = vld [vmem:[%s1] sm:$0x3]
  %266 = vset.pattern.permute.xlu0 0
  %267 = vperm.xlu0 %266, %v265
  %v268 = vpop.permute.xlu0 %267
  %vm269 = vcmp.eq.s32.totalorder %v153, %v268
  %v270 = vsel %vm269, 1, 0
  %v271 = vcvt.s32.f32 %v270
  %v272 = vmul.f32 %v264, %v271
  %v273 = vsel %vm252, %v272, 0.0
  %274 = vadd.xlane.f32.xlu0 %v273
  %v275 = vpop.xlane.xlu0 %274
  %vm276 = vcmp.eq.f32.partialorder %v249, %v255
  %v277 = vsel %vm276, %v153, 128
  %v278 = vsel %vm252, %v277, 2147483647
  %v279 = vand.u32 %v278, 65535
  %v280 = vshra.s32 %v278, 16
  %v281 = vcvt.s32.f32 %v279
  %v282 = vcvt.s32.f32 %v280
  %283 = vmin.xlane.f32.xlu0 %v282
  %v284 = vpop.xlane.xlu0 %283
  %vm285 = vcmp.eq.f32.partialorder %v282, %v284
  %v286 = vsel %vm285, %v281, inf
  %287 = vmin.xlane.f32.xlu0 %v286
  %v288 = vpop.xlane.xlu0 %287
  %v289 = vcvt.f32.s32 %v288
  %v290 = vcvt.f32.s32 %v284
  %v291 = vshll.u32 %v290, 16
  %v292 = vadd.s32 %v291, %v289
  %vm293 = vcmp.eq.s32.totalorder %v292, %v265
  %v294 = vsel %vm293, 1, 0
  %v295 = vcvt.s32.f32 %v294
  %vm296 = vcmp.eq.s32.totalorder %v153, 0
  %v297 = vsub.f32 0.0, %v275
  %v298 = vsel %vm296, %v297, 0.0
  %vm299 = vcmp.eq.s32.totalorder %v153, 1
  %301 = vset.pattern.permute.xlu0 0
  %302 = vperm.xlu0 %301, %v295
  %v303 = vpop.permute.xlu0 %302
  %v305 = vsel %vm299, %v303, 0.0
  %v306 = vadd.f32 %v298, %v305
  %v307 = vsel %vm252, %v306, 0.0
  %v308 = vrot.slane %v307, 4
  %v309 = vadd.f32 %v307, %v308
  %v310 = vrot.slane %v309, 2
  %v311 = vadd.f32 %v309, %v310
  %v312 = vrot.slane %v311, 1
  %v313 = vadd.f32 %v311, %v312
  %v314 = vmul.f32 %v313, 0.5
  %315 = vst [vmem:[%s7] sm:$0x1] %v314
  // Predicated region
  $region30: #{_forward_jit.1} parent=0 // pred_check
    _
  $region31: #{_forward_jit.1} parent=0 // pred_check_branch
    %317 = sbr.rel (0) target = $region33
  $region32: #{_forward_jit.1} parent=0 // pred_region
    _
  $region33: #{_forward_jit.1} parent=0 // pred_fallthru
    _
  // Predicated region
  $region34: #{_forward_jit.1} parent=0 // pred_check
    _
  $region35: #{_forward_jit.1} parent=0 // pred_check_branch
    %319 = sbr.rel (0) target = $region37
  $region36: #{_forward_jit.1} parent=0 // pred_region
    _
  $region37: #{_forward_jit.1} parent=0 // pred_fallthru
    _

</llo_original>
